<compile_context>
chip_gen: v5e
topology: v5e:2x2
jax: 0.10.0
libtpu: 0.0.40
codegen_flags: <defaults>
</compile_context>

<pallas_src>
import jax
import jax.numpy as jnp
from jax.experimental import pallas as pl
from jax.experimental.pallas import tpu as pltpu

NUM_VIEWS = 4
_NORM_EPS = 1e-12     # F.normalize default eps (applied to the norm)
_CLAMP_LO = 0.0005
_CLAMP_HI = 0.9995
_OUT_SUBLANES = 8
_OUT_LANES = 128


def _decoupling_loss_kernel(shared_ref, specific_ref, out_ref):
    """One group-aligned row tile.

    shared_ref / specific_ref: (TILE_N, D) blocks, TILE_N a multiple of 4.
    out_ref: (1, 8, 128) lane-dense tile filled with this tile's sum of
             -log(1 - sim) over its 4x4 block-diagonal entries.
    """
    tile_n = shared_ref.shape[0]
    g = tile_n // NUM_VIEWS  # number of 4-row view groups in this tile

    # Strided row views in the *input* dtype: a_rows[v][k, :] == shared[4*k+v, :].
    # Only the block-diagonal pairings are ever computed.
    a_rows, b_rows, inv_a, inv_b = [], [], [], []
    for v in range(NUM_VIEWS):
        av = shared_ref[pl.ds(v, g, stride=NUM_VIEWS), :]
        bv = specific_ref[pl.ds(v, g, stride=NUM_VIEWS), :]
        a_rows.append(av)
        b_rows.append(bv)
        # F.normalize(x, dim=1): x / max(||x||, eps) == x * rsqrt(max(||x||^2, eps^2))
        na = jnp.sum(av * av, axis=-1, keepdims=True, dtype=jnp.float32)
        nb = jnp.sum(bv * bv, axis=-1, keepdims=True, dtype=jnp.float32)
        inv_a.append(jax.lax.rsqrt(jnp.maximum(na, _NORM_EPS * _NORM_EPS)))
        inv_b.append(jax.lax.rsqrt(jnp.maximum(nb, _NORM_EPS * _NORM_EPS)))

    # 16 per-pair (g,1) scale factors hoisted out of the pair loop.
    scales = [[inv_a[v] * inv_b[w] for w in range(NUM_VIEWS)]
              for v in range(NUM_VIEWS)]

    acc = jnp.zeros((g, 1), jnp.float32)
    for v in range(NUM_VIEWS):
        for w in range(NUM_VIEWS):
            raw = jnp.sum(a_rows[v] * b_rows[w], axis=-1, keepdims=True,
                          dtype=jnp.float32)               # (g, 1), f32 accumulate
            sim = jnp.clip(raw * scales[v][w], _CLAMP_LO, _CLAMP_HI)
            acc = acc - jnp.log(1.0 - sim)                   # 4*TILE_N logs (EUP slot)

    total = jnp.sum(acc)
    # Lane-dense splat of the scalar partial -> unmasked vst.
    out_ref[...] = jnp.broadcast_to(total, out_ref.shape)


def _tpu_vmem_capacity_bytes():
    """Physical VMEM per TensorCore; conservative (v7x) fallback if unknown."""
    try:
        info = pltpu.get_tpu_info()
        cap = int(getattr(info, "vmem_capacity_bytes", 0) or 0)
        if cap > 0:
            return cap
    except Exception:
        pass
    return 64 << 20


def _tile_vmem_estimate(t, d, itemsize):
    io = 2 * 2 * t * d * itemsize      # 2 inputs x double-buffered pipeline blocks
    views = 2 * t * d * itemsize       # deinterleaved per-view strided copies
    temps = 2 * t * d * 4              # per-pair products / f32 temporaries
    return io + views + temps


def _pick_tile_n(n, d, itemsize, budget_bytes):
    """Largest group-aligned, layout-legal row tile within the VMEM budget,
    preferring >= 2 tiles so both v7x TensorCores get work."""
    cands = [t for t in (2048, 1024, 512, 256, 128, 64, 32, 16, 8) if n % t == 0]
    fitting = [t for t in cands if _tile_vmem_estimate(t, d, itemsize) <= budget_bytes]
    if fitting:
        multi = [t for t in fitting if n // t >= 2]
        return multi[0] if multi else fitting[0]
    if cands:
        return cands[-1]   # smallest 8-aligned divisor (vmem_limit is raised to fit)
    # TODO(synk): n is a multiple of 4 but not 8 -> single full-extent block;
    # a remainder-tile path would be needed if this ever exceeds physical VMEM.
    return n


def decoupling_shared_special_loss(shared_features, specific_features, *, tile_n=None):
    """Pallas TPU implementation of DecouplingSharedSpecialLoss.forward."""
    assert shared_features.ndim == 2 and specific_features.ndim == 2
    assert shared_features.shape == specific_features.shape
    assert shared_features.dtype == specific_features.dtype
    n, d = shared_features.shape
    assert n % NUM_VIEWS == 0, "batch must be a multiple of num_views=4"

    itemsize = jnp.dtype(shared_features.dtype).itemsize
    vmem_cap = _tpu_vmem_capacity_bytes()
    usable_cap = max(32 << 20, vmem_cap - (16 << 20))   # leave compiler headroom
    tile_budget = int(usable_cap * 0.7)

    if tile_n is None:
        tile_n = _pick_tile_n(n, d, itemsize, tile_budget)
    assert n % tile_n == 0 and tile_n % NUM_VIEWS == 0
    assert tile_n % 8 == 0 or tile_n == n, "tile_n must be 8-aligned or the full batch"

    num_tiles = n // tile_n
    est = _tile_vmem_estimate(tile_n, d, itemsize)
    vmem_limit = int(min(usable_cap, max(48 << 20, est + (8 << 20))))

    cost = pl.CostEstimate(
        flops=int(12 * n * d),
        transcendentals=int(4 * n),
        bytes_accessed=int(2 * n * d * itemsize
                           + num_tiles * _OUT_SUBLANES * _OUT_LANES * 4),
    )

    partials = pl.pallas_call(
        _decoupling_loss_kernel,
        out_shape=jax.ShapeDtypeStruct((num_tiles, _OUT_SUBLANES, _OUT_LANES),
                                       jnp.float32),
        grid=(num_tiles,),
        in_specs=[
            pl.BlockSpec((tile_n, d), lambda i: (i, 0)),
            pl.BlockSpec((tile_n, d), lambda i: (i, 0)),
        ],
        out_specs=pl.BlockSpec((1, _OUT_SUBLANES, _OUT_LANES), lambda i: (i, 0, 0)),
        compiler_params=pltpu.CompilerParams(
            dimension_semantics=("parallel",),
            vmem_limit_bytes=vmem_limit,
        ),
        cost_estimate=cost,
    )(shared_features, specific_features)

    # Each partial tile is a lane-dense splat of its tile's block-diagonal sum:
    # sum(all lanes) / (8*128) / 16 == sum over groups of mean over 4x4 block.
    denom = float(NUM_VIEWS * NUM_VIEWS * _OUT_SUBLANES * _OUT_LANES)
    return jnp.sum(partials) / denom


def _reference(shared_features, specific_features):
    """Pure-JAX reference mirroring the PyTorch loop, for verification."""
    batch = shared_features.shape[0]
    total = 0.0
    for i in range(batch // NUM_VIEWS):
        a = shared_features[NUM_VIEWS * i:NUM_VIEWS * (i + 1)]
        b = specific_features[NUM_VIEWS * i:NUM_VIEWS * (i + 1)]
        a_n = a / jnp.maximum(jnp.linalg.norm(a, axis=1, keepdims=True), _NORM_EPS)
        b_n = b / jnp.maximum(jnp.linalg.norm(b, axis=1, keepdims=True), _NORM_EPS)
        sim = jnp.clip(a_n @ b_n.T, _CLAMP_LO, _CLAMP_HI)
        total = total + jnp.mean(-jnp.log(1.0 - sim))
    return total


if __name__ == "__main__":
    key = jax.random.PRNGKey(0)
    k1, k2 = jax.random.split(key)
    batch, dim = 16, 32  # batch must be a multiple of num_views=4
    shared = jax.random.normal(k1, (batch, dim), dtype=jnp.float32)
    specific = jax.random.normal(k2, (batch, dim), dtype=jnp.float32)

    ref = _reference(shared, specific)

    # Default tile choice (prefers a multi-tile grid here -> 2 tiles of 8 rows).
    loss = jax.block_until_ready(decoupling_shared_special_loss(shared, specific))
    assert jnp.allclose(loss, ref, rtol=1e-5, atol=1e-5), (loss, ref)

    # Single full-batch tile.
    loss_full = jax.block_until_ready(
        decoupling_shared_special_loss(shared, specific, tile_n=batch))
    assert jnp.allclose(loss_full, ref, rtol=1e-5, atol=1e-5), (loss_full, ref)

    # Explicit multi-tile grid (exercises the pipelined / parallel path).
    loss_tiled = jax.block_until_ready(
        decoupling_shared_special_loss(shared, specific, tile_n=8))
    assert jnp.allclose(loss_tiled, ref, rtol=1e-5, atol=1e-5), (loss_tiled, ref)

    print("KERNEL_OK")
</pallas_src>

<mosaic_0001>
module attributes {stable_mosaic.version = 11 : i64} {
  func.func @_decoupling_loss_kernel(%arg0: i32, %arg1: memref<8x32xf32, #tpu.memory_space<vmem>>, %arg2: memref<8x32xf32, #tpu.memory_space<vmem>>, %arg3: memref<1x8x128xf32, #tpu.memory_space<vmem>>) attributes {dimension_semantics = [#tpu.dimension_semantics<parallel>], iteration_bounds = array<i64: 2>, scalar_prefetch = 0 : i64, scratch_operands = 0 : i64, tpu.core_type = #tpu.core_type<tc>, window_params = [{transform_indices = @transform_0, window_bounds = array<i64: 8, 32>}, {transform_indices = @transform_1, window_bounds = array<i64: 8, 32>}, {transform_indices = @transform_2, window_bounds = array<i64: 1, 8, 128>}]} {
    %c0 = arith.constant 0 : index
    %c0_0 = arith.constant 0 : index
    %0 = tpu.strided_load %arg1[%c0, %c0_0] {strides = array<i32: 4, 1>} : memref<8x32xf32, #tpu.memory_space<vmem>>, vector<2x32xf32>
    %c0_1 = arith.constant 0 : index
    %c0_2 = arith.constant 0 : index
    %1 = tpu.strided_load %arg2[%c0_1, %c0_2] {strides = array<i32: 4, 1>} : memref<8x32xf32, #tpu.memory_space<vmem>>, vector<2x32xf32>
    %2 = arith.mulf %0, %0 : vector<2x32xf32>
    %cst = arith.constant dense<0.000000e+00> : vector<2xf32>
    %3 = vector.multi_reduction <add>, %2, %cst [1] : vector<2x32xf32> to vector<2xf32>
    %4 = vector.shape_cast %3 : vector<2xf32> to vector<2x1xf32>
    %5 = arith.mulf %1, %1 : vector<2x32xf32>
    %cst_3 = arith.constant dense<0.000000e+00> : vector<2xf32>
    %6 = vector.multi_reduction <add>, %5, %cst_3 [1] : vector<2x32xf32> to vector<2xf32>
    %7 = vector.shape_cast %6 : vector<2xf32> to vector<2x1xf32>
    %cst_4 = arith.constant 1.000000e-24 : f32
    %8 = vector.broadcast %cst_4 : f32 to vector<2x1xf32>
    %9 = arith.maximumf %4, %8 : vector<2x1xf32>
    %10 = math.rsqrt %9 : vector<2x1xf32>
    %cst_5 = arith.constant 1.000000e-24 : f32
    %11 = vector.broadcast %cst_5 : f32 to vector<2x1xf32>
    %12 = arith.maximumf %7, %11 : vector<2x1xf32>
    %13 = math.rsqrt %12 : vector<2x1xf32>
    %c1 = arith.constant 1 : index
    %c0_6 = arith.constant 0 : index
    %14 = tpu.strided_load %arg1[%c1, %c0_6] {strides = array<i32: 4, 1>} : memref<8x32xf32, #tpu.memory_space<vmem>>, vector<2x32xf32>
    %c1_7 = arith.constant 1 : index
    %c0_8 = arith.constant 0 : index
    %15 = tpu.strided_load %arg2[%c1_7, %c0_8] {strides = array<i32: 4, 1>} : memref<8x32xf32, #tpu.memory_space<vmem>>, vector<2x32xf32>
    %16 = arith.mulf %14, %14 : vector<2x32xf32>
    %cst_9 = arith.constant dense<0.000000e+00> : vector<2xf32>
    %17 = vector.multi_reduction <add>, %16, %cst_9 [1] : vector<2x32xf32> to vector<2xf32>
    %18 = vector.shape_cast %17 : vector<2xf32> to vector<2x1xf32>
    %19 = arith.mulf %15, %15 : vector<2x32xf32>
    %cst_10 = arith.constant dense<0.000000e+00> : vector<2xf32>
    %20 = vector.multi_reduction <add>, %19, %cst_10 [1] : vector<2x32xf32> to vector<2xf32>
    %21 = vector.shape_cast %20 : vector<2xf32> to vector<2x1xf32>
    %cst_11 = arith.constant 1.000000e-24 : f32
    %22 = vector.broadcast %cst_11 : f32 to vector<2x1xf32>
    %23 = arith.maximumf %18, %22 : vector<2x1xf32>
    %24 = math.rsqrt %23 : vector<2x1xf32>
    %cst_12 = arith.constant 1.000000e-24 : f32
    %25 = vector.broadcast %cst_12 : f32 to vector<2x1xf32>
    %26 = arith.maximumf %21, %25 : vector<2x1xf32>
    %27 = math.rsqrt %26 : vector<2x1xf32>
    %c2 = arith.constant 2 : index
    %c0_13 = arith.constant 0 : index
    %28 = tpu.strided_load %arg1[%c2, %c0_13] {strides = array<i32: 4, 1>} : memref<8x32xf32, #tpu.memory_space<vmem>>, vector<2x32xf32>
    %c2_14 = arith.constant 2 : index
    %c0_15 = arith.constant 0 : index
    %29 = tpu.strided_load %arg2[%c2_14, %c0_15] {strides = array<i32: 4, 1>} : memref<8x32xf32, #tpu.memory_space<vmem>>, vector<2x32xf32>
    %30 = arith.mulf %28, %28 : vector<2x32xf32>
    %cst_16 = arith.constant dense<0.000000e+00> : vector<2xf32>
    %31 = vector.multi_reduction <add>, %30, %cst_16 [1] : vector<2x32xf32> to vector<2xf32>
    %32 = vector.shape_cast %31 : vector<2xf32> to vector<2x1xf32>
    %33 = arith.mulf %29, %29 : vector<2x32xf32>
    %cst_17 = arith.constant dense<0.000000e+00> : vector<2xf32>
    %34 = vector.multi_reduction <add>, %33, %cst_17 [1] : vector<2x32xf32> to vector<2xf32>
    %35 = vector.shape_cast %34 : vector<2xf32> to vector<2x1xf32>
    %cst_18 = arith.constant 1.000000e-24 : f32
    %36 = vector.broadcast %cst_18 : f32 to vector<2x1xf32>
    %37 = arith.maximumf %32, %36 : vector<2x1xf32>
    %38 = math.rsqrt %37 : vector<2x1xf32>
    %cst_19 = arith.constant 1.000000e-24 : f32
    %39 = vector.broadcast %cst_19 : f32 to vector<2x1xf32>
    %40 = arith.maximumf %35, %39 : vector<2x1xf32>
    %41 = math.rsqrt %40 : vector<2x1xf32>
    %c3 = arith.constant 3 : index
    %c0_20 = arith.constant 0 : index
    %42 = tpu.strided_load %arg1[%c3, %c0_20] {strides = array<i32: 4, 1>} : memref<8x32xf32, #tpu.memory_space<vmem>>, vector<2x32xf32>
    %c3_21 = arith.constant 3 : index
    %c0_22 = arith.constant 0 : index
    %43 = tpu.strided_load %arg2[%c3_21, %c0_22] {strides = array<i32: 4, 1>} : memref<8x32xf32, #tpu.memory_space<vmem>>, vector<2x32xf32>
    %44 = arith.mulf %42, %42 : vector<2x32xf32>
    %cst_23 = arith.constant dense<0.000000e+00> : vector<2xf32>
    %45 = vector.multi_reduction <add>, %44, %cst_23 [1] : vector<2x32xf32> to vector<2xf32>
    %46 = vector.shape_cast %45 : vector<2xf32> to vector<2x1xf32>
    %47 = arith.mulf %43, %43 : vector<2x32xf32>
    %cst_24 = arith.constant dense<0.000000e+00> : vector<2xf32>
    %48 = vector.multi_reduction <add>, %47, %cst_24 [1] : vector<2x32xf32> to vector<2xf32>
    %49 = vector.shape_cast %48 : vector<2xf32> to vector<2x1xf32>
    %cst_25 = arith.constant 1.000000e-24 : f32
    %50 = vector.broadcast %cst_25 : f32 to vector<2x1xf32>
    %51 = arith.maximumf %46, %50 : vector<2x1xf32>
    %52 = math.rsqrt %51 : vector<2x1xf32>
    %cst_26 = arith.constant 1.000000e-24 : f32
    %53 = vector.broadcast %cst_26 : f32 to vector<2x1xf32>
    %54 = arith.maximumf %49, %53 : vector<2x1xf32>
    %55 = math.rsqrt %54 : vector<2x1xf32>
    %56 = arith.mulf %10, %13 : vector<2x1xf32>
    %57 = arith.mulf %10, %27 : vector<2x1xf32>
    %58 = arith.mulf %10, %41 : vector<2x1xf32>
    %59 = arith.mulf %10, %55 : vector<2x1xf32>
    %60 = arith.mulf %24, %13 : vector<2x1xf32>
    %61 = arith.mulf %24, %27 : vector<2x1xf32>
    %62 = arith.mulf %24, %41 : vector<2x1xf32>
    %63 = arith.mulf %24, %55 : vector<2x1xf32>
    %64 = arith.mulf %38, %13 : vector<2x1xf32>
    %65 = arith.mulf %38, %27 : vector<2x1xf32>
    %66 = arith.mulf %38, %41 : vector<2x1xf32>
    %67 = arith.mulf %38, %55 : vector<2x1xf32>
    %68 = arith.mulf %52, %13 : vector<2x1xf32>
    %69 = arith.mulf %52, %27 : vector<2x1xf32>
    %70 = arith.mulf %52, %41 : vector<2x1xf32>
    %71 = arith.mulf %52, %55 : vector<2x1xf32>
    %cst_27 = arith.constant 0.000000e+00 : f32
    %72 = vector.broadcast %cst_27 : f32 to vector<2x1xf32>
    %73 = arith.mulf %0, %1 : vector<2x32xf32>
    %cst_28 = arith.constant dense<0.000000e+00> : vector<2xf32>
    %74 = vector.multi_reduction <add>, %73, %cst_28 [1] : vector<2x32xf32> to vector<2xf32>
    %75 = vector.shape_cast %74 : vector<2xf32> to vector<2x1xf32>
    %76 = arith.mulf %75, %56 : vector<2x1xf32>
    %cst_29 = arith.constant 5.000000e-04 : f32
    %cst_30 = arith.constant 0.999499976 : f32
    %77 = vector.broadcast %cst_29 : f32 to vector<2x1xf32>
    %78 = arith.maximumf %77, %76 : vector<2x1xf32>
    %79 = vector.broadcast %cst_30 : f32 to vector<2x1xf32>
    %80 = arith.minimumf %79, %78 : vector<2x1xf32>
    %cst_31 = arith.constant 1.000000e+00 : f32
    %81 = vector.broadcast %cst_31 : f32 to vector<2x1xf32>
    %82 = arith.subf %81, %80 : vector<2x1xf32>
    %83 = math.log %82 : vector<2x1xf32>
    %84 = arith.subf %72, %83 : vector<2x1xf32>
    %85 = arith.mulf %0, %15 : vector<2x32xf32>
    %cst_32 = arith.constant dense<0.000000e+00> : vector<2xf32>
    %86 = vector.multi_reduction <add>, %85, %cst_32 [1] : vector<2x32xf32> to vector<2xf32>
    %87 = vector.shape_cast %86 : vector<2xf32> to vector<2x1xf32>
    %88 = arith.mulf %87, %57 : vector<2x1xf32>
    %cst_33 = arith.constant 5.000000e-04 : f32
    %cst_34 = arith.constant 0.999499976 : f32
    %89 = vector.broadcast %cst_33 : f32 to vector<2x1xf32>
    %90 = arith.maximumf %89, %88 : vector<2x1xf32>
    %91 = vector.broadcast %cst_34 : f32 to vector<2x1xf32>
    %92 = arith.minimumf %91, %90 : vector<2x1xf32>
    %cst_35 = arith.constant 1.000000e+00 : f32
    %93 = vector.broadcast %cst_35 : f32 to vector<2x1xf32>
    %94 = arith.subf %93, %92 : vector<2x1xf32>
    %95 = math.log %94 : vector<2x1xf32>
    %96 = arith.subf %84, %95 : vector<2x1xf32>
    %97 = arith.mulf %0, %29 : vector<2x32xf32>
    %cst_36 = arith.constant dense<0.000000e+00> : vector<2xf32>
    %98 = vector.multi_reduction <add>, %97, %cst_36 [1] : vector<2x32xf32> to vector<2xf32>
    %99 = vector.shape_cast %98 : vector<2xf32> to vector<2x1xf32>
    %100 = arith.mulf %99, %58 : vector<2x1xf32>
    %cst_37 = arith.constant 5.000000e-04 : f32
    %cst_38 = arith.constant 0.999499976 : f32
    %101 = vector.broadcast %cst_37 : f32 to vector<2x1xf32>
    %102 = arith.maximumf %101, %100 : vector<2x1xf32>
    %103 = vector.broadcast %cst_38 : f32 to vector<2x1xf32>
    %104 = arith.minimumf %103, %102 : vector<2x1xf32>
    %cst_39 = arith.constant 1.000000e+00 : f32
    %105 = vector.broadcast %cst_39 : f32 to vector<2x1xf32>
    %106 = arith.subf %105, %104 : vector<2x1xf32>
    %107 = math.log %106 : vector<2x1xf32>
    %108 = arith.subf %96, %107 : vector<2x1xf32>
    %109 = arith.mulf %0, %43 : vector<2x32xf32>
    %cst_40 = arith.constant dense<0.000000e+00> : vector<2xf32>
    %110 = vector.multi_reduction <add>, %109, %cst_40 [1] : vector<2x32xf32> to vector<2xf32>
    %111 = vector.shape_cast %110 : vector<2xf32> to vector<2x1xf32>
    %112 = arith.mulf %111, %59 : vector<2x1xf32>
    %cst_41 = arith.constant 5.000000e-04 : f32
    %cst_42 = arith.constant 0.999499976 : f32
    %113 = vector.broadcast %cst_41 : f32 to vector<2x1xf32>
    %114 = arith.maximumf %113, %112 : vector<2x1xf32>
    %115 = vector.broadcast %cst_42 : f32 to vector<2x1xf32>
    %116 = arith.minimumf %115, %114 : vector<2x1xf32>
    %cst_43 = arith.constant 1.000000e+00 : f32
    %117 = vector.broadcast %cst_43 : f32 to vector<2x1xf32>
    %118 = arith.subf %117, %116 : vector<2x1xf32>
    %119 = math.log %118 : vector<2x1xf32>
    %120 = arith.subf %108, %119 : vector<2x1xf32>
    %121 = arith.mulf %14, %1 : vector<2x32xf32>
    %cst_44 = arith.constant dense<0.000000e+00> : vector<2xf32>
    %122 = vector.multi_reduction <add>, %121, %cst_44 [1] : vector<2x32xf32> to vector<2xf32>
    %123 = vector.shape_cast %122 : vector<2xf32> to vector<2x1xf32>
    %124 = arith.mulf %123, %60 : vector<2x1xf32>
    %cst_45 = arith.constant 5.000000e-04 : f32
    %cst_46 = arith.constant 0.999499976 : f32
    %125 = vector.broadcast %cst_45 : f32 to vector<2x1xf32>
    %126 = arith.maximumf %125, %124 : vector<2x1xf32>
    %127 = vector.broadcast %cst_46 : f32 to vector<2x1xf32>
    %128 = arith.minimumf %127, %126 : vector<2x1xf32>
    %cst_47 = arith.constant 1.000000e+00 : f32
    %129 = vector.broadcast %cst_47 : f32 to vector<2x1xf32>
    %130 = arith.subf %129, %128 : vector<2x1xf32>
    %131 = math.log %130 : vector<2x1xf32>
    %132 = arith.subf %120, %131 : vector<2x1xf32>
    %133 = arith.mulf %14, %15 : vector<2x32xf32>
    %cst_48 = arith.constant dense<0.000000e+00> : vector<2xf32>
    %134 = vector.multi_reduction <add>, %133, %cst_48 [1] : vector<2x32xf32> to vector<2xf32>
    %135 = vector.shape_cast %134 : vector<2xf32> to vector<2x1xf32>
    %136 = arith.mulf %135, %61 : vector<2x1xf32>
    %cst_49 = arith.constant 5.000000e-04 : f32
    %cst_50 = arith.constant 0.999499976 : f32
    %137 = vector.broadcast %cst_49 : f32 to vector<2x1xf32>
    %138 = arith.maximumf %137, %136 : vector<2x1xf32>
    %139 = vector.broadcast %cst_50 : f32 to vector<2x1xf32>
    %140 = arith.minimumf %139, %138 : vector<2x1xf32>
    %cst_51 = arith.constant 1.000000e+00 : f32
    %141 = vector.broadcast %cst_51 : f32 to vector<2x1xf32>
    %142 = arith.subf %141, %140 : vector<2x1xf32>
    %143 = math.log %142 : vector<2x1xf32>
    %144 = arith.subf %132, %143 : vector<2x1xf32>
    %145 = arith.mulf %14, %29 : vector<2x32xf32>
    %cst_52 = arith.constant dense<0.000000e+00> : vector<2xf32>
    %146 = vector.multi_reduction <add>, %145, %cst_52 [1] : vector<2x32xf32> to vector<2xf32>
    %147 = vector.shape_cast %146 : vector<2xf32> to vector<2x1xf32>
    %148 = arith.mulf %147, %62 : vector<2x1xf32>
    %cst_53 = arith.constant 5.000000e-04 : f32
    %cst_54 = arith.constant 0.999499976 : f32
    %149 = vector.broadcast %cst_53 : f32 to vector<2x1xf32>
    %150 = arith.maximumf %149, %148 : vector<2x1xf32>
    %151 = vector.broadcast %cst_54 : f32 to vector<2x1xf32>
    %152 = arith.minimumf %151, %150 : vector<2x1xf32>
    %cst_55 = arith.constant 1.000000e+00 : f32
    %153 = vector.broadcast %cst_55 : f32 to vector<2x1xf32>
    %154 = arith.subf %153, %152 : vector<2x1xf32>
    %155 = math.log %154 : vector<2x1xf32>
    %156 = arith.subf %144, %155 : vector<2x1xf32>
    %157 = arith.mulf %14, %43 : vector<2x32xf32>
    %cst_56 = arith.constant dense<0.000000e+00> : vector<2xf32>
    %158 = vector.multi_reduction <add>, %157, %cst_56 [1] : vector<2x32xf32> to vector<2xf32>
    %159 = vector.shape_cast %158 : vector<2xf32> to vector<2x1xf32>
    %160 = arith.mulf %159, %63 : vector<2x1xf32>
    %cst_57 = arith.constant 5.000000e-04 : f32
    %cst_58 = arith.constant 0.999499976 : f32
    %161 = vector.broadcast %cst_57 : f32 to vector<2x1xf32>
    %162 = arith.maximumf %161, %160 : vector<2x1xf32>
    %163 = vector.broadcast %cst_58 : f32 to vector<2x1xf32>
    %164 = arith.minimumf %163, %162 : vector<2x1xf32>
    %cst_59 = arith.constant 1.000000e+00 : f32
    %165 = vector.broadcast %cst_59 : f32 to vector<2x1xf32>
    %166 = arith.subf %165, %164 : vector<2x1xf32>
    %167 = math.log %166 : vector<2x1xf32>
    %168 = arith.subf %156, %167 : vector<2x1xf32>
    %169 = arith.mulf %28, %1 : vector<2x32xf32>
    %cst_60 = arith.constant dense<0.000000e+00> : vector<2xf32>
    %170 = vector.multi_reduction <add>, %169, %cst_60 [1] : vector<2x32xf32> to vector<2xf32>
    %171 = vector.shape_cast %170 : vector<2xf32> to vector<2x1xf32>
    %172 = arith.mulf %171, %64 : vector<2x1xf32>
    %cst_61 = arith.constant 5.000000e-04 : f32
    %cst_62 = arith.constant 0.999499976 : f32
    %173 = vector.broadcast %cst_61 : f32 to vector<2x1xf32>
    %174 = arith.maximumf %173, %172 : vector<2x1xf32>
    %175 = vector.broadcast %cst_62 : f32 to vector<2x1xf32>
    %176 = arith.minimumf %175, %174 : vector<2x1xf32>
    %cst_63 = arith.constant 1.000000e+00 : f32
    %177 = vector.broadcast %cst_63 : f32 to vector<2x1xf32>
    %178 = arith.subf %177, %176 : vector<2x1xf32>
    %179 = math.log %178 : vector<2x1xf32>
    %180 = arith.subf %168, %179 : vector<2x1xf32>
    %181 = arith.mulf %28, %15 : vector<2x32xf32>
    %cst_64 = arith.constant dense<0.000000e+00> : vector<2xf32>
    %182 = vector.multi_reduction <add>, %181, %cst_64 [1] : vector<2x32xf32> to vector<2xf32>
    %183 = vector.shape_cast %182 : vector<2xf32> to vector<2x1xf32>
    %184 = arith.mulf %183, %65 : vector<2x1xf32>
    %cst_65 = arith.constant 5.000000e-04 : f32
    %cst_66 = arith.constant 0.999499976 : f32
    %185 = vector.broadcast %cst_65 : f32 to vector<2x1xf32>
    %186 = arith.maximumf %185, %184 : vector<2x1xf32>
    %187 = vector.broadcast %cst_66 : f32 to vector<2x1xf32>
    %188 = arith.minimumf %187, %186 : vector<2x1xf32>
    %cst_67 = arith.constant 1.000000e+00 : f32
    %189 = vector.broadcast %cst_67 : f32 to vector<2x1xf32>
    %190 = arith.subf %189, %188 : vector<2x1xf32>
    %191 = math.log %190 : vector<2x1xf32>
    %192 = arith.subf %180, %191 : vector<2x1xf32>
    %193 = arith.mulf %28, %29 : vector<2x32xf32>
    %cst_68 = arith.constant dense<0.000000e+00> : vector<2xf32>
    %194 = vector.multi_reduction <add>, %193, %cst_68 [1] : vector<2x32xf32> to vector<2xf32>
    %195 = vector.shape_cast %194 : vector<2xf32> to vector<2x1xf32>
    %196 = arith.mulf %195, %66 : vector<2x1xf32>
    %cst_69 = arith.constant 5.000000e-04 : f32
    %cst_70 = arith.constant 0.999499976 : f32
    %197 = vector.broadcast %cst_69 : f32 to vector<2x1xf32>
    %198 = arith.maximumf %197, %196 : vector<2x1xf32>
    %199 = vector.broadcast %cst_70 : f32 to vector<2x1xf32>
    %200 = arith.minimumf %199, %198 : vector<2x1xf32>
    %cst_71 = arith.constant 1.000000e+00 : f32
    %201 = vector.broadcast %cst_71 : f32 to vector<2x1xf32>
    %202 = arith.subf %201, %200 : vector<2x1xf32>
    %203 = math.log %202 : vector<2x1xf32>
    %204 = arith.subf %192, %203 : vector<2x1xf32>
    %205 = arith.mulf %28, %43 : vector<2x32xf32>
    %cst_72 = arith.constant dense<0.000000e+00> : vector<2xf32>
    %206 = vector.multi_reduction <add>, %205, %cst_72 [1] : vector<2x32xf32> to vector<2xf32>
    %207 = vector.shape_cast %206 : vector<2xf32> to vector<2x1xf32>
    %208 = arith.mulf %207, %67 : vector<2x1xf32>
    %cst_73 = arith.constant 5.000000e-04 : f32
    %cst_74 = arith.constant 0.999499976 : f32
    %209 = vector.broadcast %cst_73 : f32 to vector<2x1xf32>
    %210 = arith.maximumf %209, %208 : vector<2x1xf32>
    %211 = vector.broadcast %cst_74 : f32 to vector<2x1xf32>
    %212 = arith.minimumf %211, %210 : vector<2x1xf32>
    %cst_75 = arith.constant 1.000000e+00 : f32
    %213 = vector.broadcast %cst_75 : f32 to vector<2x1xf32>
    %214 = arith.subf %213, %212 : vector<2x1xf32>
    %215 = math.log %214 : vector<2x1xf32>
    %216 = arith.subf %204, %215 : vector<2x1xf32>
    %217 = arith.mulf %42, %1 : vector<2x32xf32>
    %cst_76 = arith.constant dense<0.000000e+00> : vector<2xf32>
    %218 = vector.multi_reduction <add>, %217, %cst_76 [1] : vector<2x32xf32> to vector<2xf32>
    %219 = vector.shape_cast %218 : vector<2xf32> to vector<2x1xf32>
    %220 = arith.mulf %219, %68 : vector<2x1xf32>
    %cst_77 = arith.constant 5.000000e-04 : f32
    %cst_78 = arith.constant 0.999499976 : f32
    %221 = vector.broadcast %cst_77 : f32 to vector<2x1xf32>
    %222 = arith.maximumf %221, %220 : vector<2x1xf32>
    %223 = vector.broadcast %cst_78 : f32 to vector<2x1xf32>
    %224 = arith.minimumf %223, %222 : vector<2x1xf32>
    %cst_79 = arith.constant 1.000000e+00 : f32
    %225 = vector.broadcast %cst_79 : f32 to vector<2x1xf32>
    %226 = arith.subf %225, %224 : vector<2x1xf32>
    %227 = math.log %226 : vector<2x1xf32>
    %228 = arith.subf %216, %227 : vector<2x1xf32>
    %229 = arith.mulf %42, %15 : vector<2x32xf32>
    %cst_80 = arith.constant dense<0.000000e+00> : vector<2xf32>
    %230 = vector.multi_reduction <add>, %229, %cst_80 [1] : vector<2x32xf32> to vector<2xf32>
    %231 = vector.shape_cast %230 : vector<2xf32> to vector<2x1xf32>
    %232 = arith.mulf %231, %69 : vector<2x1xf32>
    %cst_81 = arith.constant 5.000000e-04 : f32
    %cst_82 = arith.constant 0.999499976 : f32
    %233 = vector.broadcast %cst_81 : f32 to vector<2x1xf32>
    %234 = arith.maximumf %233, %232 : vector<2x1xf32>
    %235 = vector.broadcast %cst_82 : f32 to vector<2x1xf32>
    %236 = arith.minimumf %235, %234 : vector<2x1xf32>
    %cst_83 = arith.constant 1.000000e+00 : f32
    %237 = vector.broadcast %cst_83 : f32 to vector<2x1xf32>
    %238 = arith.subf %237, %236 : vector<2x1xf32>
    %239 = math.log %238 : vector<2x1xf32>
    %240 = arith.subf %228, %239 : vector<2x1xf32>
    %241 = arith.mulf %42, %29 : vector<2x32xf32>
    %cst_84 = arith.constant dense<0.000000e+00> : vector<2xf32>
    %242 = vector.multi_reduction <add>, %241, %cst_84 [1] : vector<2x32xf32> to vector<2xf32>
    %243 = vector.shape_cast %242 : vector<2xf32> to vector<2x1xf32>
    %244 = arith.mulf %243, %70 : vector<2x1xf32>
    %cst_85 = arith.constant 5.000000e-04 : f32
    %cst_86 = arith.constant 0.999499976 : f32
    %245 = vector.broadcast %cst_85 : f32 to vector<2x1xf32>
    %246 = arith.maximumf %245, %244 : vector<2x1xf32>
    %247 = vector.broadcast %cst_86 : f32 to vector<2x1xf32>
    %248 = arith.minimumf %247, %246 : vector<2x1xf32>
    %cst_87 = arith.constant 1.000000e+00 : f32
    %249 = vector.broadcast %cst_87 : f32 to vector<2x1xf32>
    %250 = arith.subf %249, %248 : vector<2x1xf32>
    %251 = math.log %250 : vector<2x1xf32>
    %252 = arith.subf %240, %251 : vector<2x1xf32>
    %253 = arith.mulf %42, %43 : vector<2x32xf32>
    %cst_88 = arith.constant dense<0.000000e+00> : vector<2xf32>
    %254 = vector.multi_reduction <add>, %253, %cst_88 [1] : vector<2x32xf32> to vector<2xf32>
    %255 = vector.shape_cast %254 : vector<2xf32> to vector<2x1xf32>
    %256 = arith.mulf %255, %71 : vector<2x1xf32>
    %cst_89 = arith.constant 5.000000e-04 : f32
    %cst_90 = arith.constant 0.999499976 : f32
    %257 = vector.broadcast %cst_89 : f32 to vector<2x1xf32>
    %258 = arith.maximumf %257, %256 : vector<2x1xf32>
    %259 = vector.broadcast %cst_90 : f32 to vector<2x1xf32>
    %260 = arith.minimumf %259, %258 : vector<2x1xf32>
    %cst_91 = arith.constant 1.000000e+00 : f32
    %261 = vector.broadcast %cst_91 : f32 to vector<2x1xf32>
    %262 = arith.subf %261, %260 : vector<2x1xf32>
    %263 = math.log %262 : vector<2x1xf32>
    %264 = arith.subf %252, %263 : vector<2x1xf32>
    %265 = vector.shape_cast %264 : vector<2x1xf32> to vector<1x2x1xf32>
    %cst_92 = arith.constant dense<0.000000e+00> : vector<1xf32>
    %266 = vector.multi_reduction <add>, %265, %cst_92 [1, 2] : vector<1x2x1xf32> to vector<1xf32>
    %267 = vector.shape_cast %266 : vector<1xf32> to vector<1x1x1xf32>
    %268 = vector.extract %267[0, 0, 0] : f32 from vector<1x1x1xf32>
    %269 = vector.broadcast %268 : f32 to vector<1x8x128xf32>
    %c0_93 = arith.constant 0 : index
    %c0_94 = arith.constant 0 : index
    %c0_95 = arith.constant 0 : index
    %270 = vector.load %arg3[%c0_93, %c0_94, %c0_95] : memref<1x8x128xf32, #tpu.memory_space<vmem>>, vector<1x8x128xf32>
    tpu.vector_store %arg3[%c0_93, %c0_94, %c0_95], %269 {strides = array<i32>} : memref<1x8x128xf32, #tpu.memory_space<vmem>>, vector<1x8x128xf32>,
    return
  }
  func.func @transform_0(%arg0: i32) -> (i32, i32) {
    %c0_i32 = arith.constant 0 : i32
    %c0_i32_0 = arith.constant 0 : i32
    return %arg0, %c0_i32 : i32, i32
  }
  func.func @transform_1(%arg0: i32) -> (i32, i32) {
    %c0_i32 = arith.constant 0 : i32
    %c0_i32_0 = arith.constant 0 : i32
    return %arg0, %c0_i32 : i32, i32
  }
  func.func @transform_2(%arg0: i32) -> (i32, i32, i32) {
    %c0_i32 = arith.constant 0 : i32
    %c0_i32_0 = arith.constant 0 : i32
    %c0_i32_1 = arith.constant 0 : i32
    return %arg0, %c0_i32, %c0_i32_0 : i32, i32, i32
  }
}

</mosaic_0001>

<llo_original>
// kernel: tpu_custom_call.1
$region0: #{tpu_custom_call.1}
  #allocation0 [shape = 'u32[]', space=smem, size = 0x4, offset = 0x4, fixed_abs, tag = 'smem constant byte address 0x4 - core index']
  #allocation1 [shape = 'u32[72,128]{1,0:T(1,128)}', space=vmem, size = 0x9000, scoped, tag = 'internal scratch']
  %s0 = inlined_call_operand.hbm [shape: f32[16,32], index: 0, kind: input, shape index: {}]
  %s1 = inlined_call_operand.hbm [shape: f32[16,32], index: 1, kind: input, shape index: {}]
  %s2 = inlined_call_operand.hbm [shape: f32[2,8,128], index: 2, kind: output, shape index: {}]
  %s3 = sld [smem:[#allocation0]]
  $region49: #{tpu_custom_call.1} parent=0
    _
  %s5 = ssub.s32 1, %s3
  %s6 = scalar_select 0, %s5, %s3
  $region1: #{tpu_custom_call.1} parent=0
    #allocation2 [shape = 'u8[8192]{0}', space=vmem, size = 0x2000, scoped, tag = 'input window, operand 0']
    #allocation3 [shape = 's32[2]{0}', space=sflag, size = 0x8, scoped, tag = 'scoped memory for tpu_custom_call.1']
    #allocation4 [shape = 's32[2]{0}', space=sflag, size = 0x8, scoped, tag = 'scoped memory for tpu_custom_call.1']
    #allocation5 [shape = 'u8[8192]{0}', space=vmem, size = 0x2000, scoped, tag = 'input window, operand 1']
    #allocation6 [shape = 's32[2]{0}', space=sflag, size = 0x8, scoped, tag = 'scoped memory for tpu_custom_call.1']
    #allocation7 [shape = 'u8[8192]{0}', space=vmem, size = 0x2000, scoped, tag = 'output window, operand 0']
    %7 = vsyncpa [#allocation3], 0
    %s8 = scalar_lea.sflag [#allocation3], 1
    %9 = vsyncpa %s8, 0
    %10 = vsyncpa [#allocation6], 0
    %s11 = scalar_lea.sflag [#allocation6], 1
    %12 = vsyncpa %s11, 0
    %13 = vsyncpa [#allocation4], 0
    %s14 = scalar_lea.sflag [#allocation4], 1
    %15 = vsyncpa %s14, 0
    loop: start=0, step=1, limit=4
    $region2: #{tpu_custom_call.1} parent=1 // loop_pre_header
      _
    $region3: #{tpu_custom_call.1} parent=1 // loop_header
      %s17 = sphi 0, %s21
      %p18 = scmp.ge.s32.totalorder %s17, 4
      %s27 = sphi 0, %s29
      %s30 = sphi 0, %s27
      %s31 = sphi 0, %s30
      %s47 = sphi 0, %s31
      %s53 = sphi 0, %s55
      %s56 = sphi 0, %s53
      %s57 = sphi 0, %s56
      %s73 = sphi 0, %s57
      %s79 = sphi 0, %s81
      %s82 = sphi 0, %s79
      %s83 = sphi 0, %s82
      %s99 = sphi 0, %s83
    $region4: #{tpu_custom_call.1} parent=1 // loop_header_branch
      %20 = sbr.rel (%p18) target = $region8
    $region5: #{tpu_custom_call.1} parent=1 // loop_body
      %s22 = ssub.s32 %s17, 1
      %s23 = ssub.s32 %s17, 2
      %s24 = sadd.s32 %s17, 1
      %s25 = ssub.s32 %s17, %s24
      %p26 = scmp.eq.s32.totalorder %s25, 0
      %s28 = sadd.s32 %s27, 1
      %s29 = scalar_select %p26, %s27, %s28
      %p32 = pneg %p26
      %p33 = scmp.eq.s32.totalorder %s17, 1
      %p34 = por %p32, %p33
      %p35 = scmp.ne.s32.totalorder %s27, %s30
      %p36 = scmp.eq.s32.totalorder %s17, 0
      %p37 = por %p35, %p36
      %p38 = scmp.ne.s32.totalorder %s27, %s30
      %p39 = scmp.eq.s32.totalorder %s22, 1
      %p40 = por %p38, %p39
      %p41 = scmp.ne.s32.totalorder %s30, %s31
      %p42 = scmp.eq.s32.totalorder %s22, 0
      %p43 = por %p41, %p42
      %p44 = scmp.ne.s32.totalorder %s30, %s31
      %p45 = scmp.eq.s32.totalorder %s23, 1
      %p46 = por %p44, %p45
      %p48 = scmp.ne.s32.totalorder %s31, %s47
      %p49 = scmp.eq.s32.totalorder %s23, 0
      %p50 = por %p48, %p49
      %s51 = ssub.s32 %s17, %s24
      %p52 = scmp.eq.s32.totalorder %s51, 0
      %s54 = sadd.s32 %s53, 1
      %s55 = scalar_select %p52, %s53, %s54
      %p58 = pneg %p52
      %p59 = scmp.eq.s32.totalorder %s17, 1
      %p60 = por %p58, %p59
      %p61 = scmp.ne.s32.totalorder %s53, %s56
      %p62 = scmp.eq.s32.totalorder %s17, 0
      %p63 = por %p61, %p62
      %p64 = scmp.ne.s32.totalorder %s53, %s56
      %p65 = scmp.eq.s32.totalorder %s22, 1
      %p66 = por %p64, %p65
      %p67 = scmp.ne.s32.totalorder %s56, %s57
      %p68 = scmp.eq.s32.totalorder %s22, 0
      %p69 = por %p67, %p68
      %p70 = scmp.ne.s32.totalorder %s56, %s57
      %p71 = scmp.eq.s32.totalorder %s23, 1
      %p72 = por %p70, %p71
      %p74 = scmp.ne.s32.totalorder %s57, %s73
      %p75 = scmp.eq.s32.totalorder %s23, 0
      %p76 = por %p74, %p75
      %s77 = ssub.s32 %s17, %s24
      %p78 = scmp.eq.s32.totalorder %s77, 0
      %s80 = sadd.s32 %s79, 1
      %s81 = scalar_select %p78, %s79, %s80
      %p84 = pneg %p78
      %p85 = scmp.eq.s32.totalorder %s17, 1
      %p86 = por %p84, %p85
      %p87 = scmp.ne.s32.totalorder %s79, %s82
      %p88 = scmp.eq.s32.totalorder %s17, 0
      %p89 = por %p87, %p88
      %p90 = scmp.ne.s32.totalorder %s79, %s82
      %p91 = scmp.eq.s32.totalorder %s22, 1
      %p92 = por %p90, %p91
      %p93 = scmp.ne.s32.totalorder %s82, %s83
      %p94 = scmp.eq.s32.totalorder %s22, 0
      %p95 = por %p93, %p94
      %p96 = scmp.ne.s32.totalorder %s82, %s83
      %p97 = scmp.eq.s32.totalorder %s23, 1
      %p98 = por %p96, %p97
      %p100 = scmp.ne.s32.totalorder %s83, %s99
      %p101 = scmp.eq.s32.totalorder %s23, 0
      %p102 = por %p100, %p101
      %p103 = scmp.le.s32.totalorder 1, %s17
      %p104 = scmp.lt.s32.totalorder %s17, 3
      %p105 = pnand %p103, %p104
      %p106 = pneg %p105
      // Predicated region
      $region9: #{tpu_custom_call.1} parent=5 // pred_check
        _
      $region10: #{tpu_custom_call.1} parent=5 // pred_check_branch
        %108 = sbr.rel (%p105) target = $region12
      $region11: #{tpu_custom_call.1} parent=5 // pred_region
        %s109 = ssub.s32 %s17, 1
      $region12: #{tpu_custom_call.1} parent=5 // pred_fallthru
        _
      %p110 = scmp.lt.s32.totalorder %s17, 2
      // Predicated region
      $region13: #{tpu_custom_call.1} parent=5 // pred_check
        %p111 = pneg %p110
      $region14: #{tpu_custom_call.1} parent=5 // pred_check_branch
        %113 = sbr.rel (%p111) target = $region16
      $region15: #{tpu_custom_call.1} parent=5 // pred_region
        // Predicated region
        $region17: #{tpu_custom_call.1} parent=15 // pred_check
          %p114 = pneg %p37
        $region18: #{tpu_custom_call.1} parent=15 // pred_check_branch
          %116 = sbr.rel (%p114) target = $region20
        $region19: #{tpu_custom_call.1} parent=15 // pred_region
          %s117 = sand.u32 %s27, 1
          %s118 = scalar_lea.sflag [#allocation3], %s117
          %s119 = sand.u32 %s27, 1
          %s120 = smul.addr %s119, 8
          %s121 = scalar_lea.vmem [#allocation2], %s120
          %123 = vsyncadd %s118, 0
          %s124 = smul.addr %s17, 8
          %s125 = scalar_lea.hbm %s0, %s124
          %s127 = sshll.u32 %s125, 4
          %s128 = int_to_ptr.hbm [resolvable:$true] %s127
          %s129 = sshll.u32 %s121, 4
          %s130 = int_to_ptr.vmem [resolvable:$true] %s129
          %132 = dma.hbm_to_vmem [thread:$0]  %s128, 128, %s130, %s118
        $region20: #{tpu_custom_call.1} parent=15 // pred_fallthru
          _
        // Predicated region
        $region21: #{tpu_custom_call.1} parent=15 // pred_check
          %p133 = pneg %p63
        $region22: #{tpu_custom_call.1} parent=15 // pred_check_branch
          %135 = sbr.rel (%p133) target = $region24
        $region23: #{tpu_custom_call.1} parent=15 // pred_region
          %s136 = sand.u32 %s53, 1
          %s137 = scalar_lea.sflag [#allocation6], %s136
          %s138 = sand.u32 %s53, 1
          %s139 = smul.addr %s138, 8
          %s140 = scalar_lea.vmem [#allocation5], %s139
          %142 = vsyncadd %s137, 0
          %s143 = smul.addr %s17, 8
          %s144 = scalar_lea.hbm %s1, %s143
          %s146 = sshll.u32 %s144, 4
          %s147 = int_to_ptr.hbm [resolvable:$true] %s146
          %s148 = sshll.u32 %s140, 4
          %s149 = int_to_ptr.vmem [resolvable:$true] %s148
          %151 = dma.hbm_to_vmem [thread:$0]  %s147, 128, %s149, %s137
        $region24: #{tpu_custom_call.1} parent=15 // pred_fallthru
          _
      $region16: #{tpu_custom_call.1} parent=5 // pred_fallthru
        _
      %p152 = scmp.le.s32.totalorder 1, %s17
      %p153 = scmp.lt.s32.totalorder %s17, 3
      %p154 = pnand %p152, %p153
      %p155 = pneg %p154
      // Predicated region
      $region25: #{tpu_custom_call.1} parent=5 // pred_check
        _
      $region26: #{tpu_custom_call.1} parent=5 // pred_check_branch
        %157 = sbr.rel (%p154) target = $region28
      $region27: #{tpu_custom_call.1} parent=5 // pred_region
        %s158 = ssub.s32 %s17, 1
        %s159 = sand.u32 %s30, 1
        %s160 = scalar_lea.sflag [#allocation3], %s159
        %s161 = sand.u32 %s30, 1
        %s162 = smul.addr %s161, 8
        %s163 = scalar_lea.vmem [#allocation2], %s162
        // Predicated region
        $region29: #{tpu_custom_call.1} parent=27 // pred_check
          %p164 = pneg %p43
        $region30: #{tpu_custom_call.1} parent=27 // pred_check_branch
          %166 = sbr.rel (%p164) target = $region32
        $region31: #{tpu_custom_call.1} parent=27 // pred_region
          %168 = dma.done %s160, 128
        $region32: #{tpu_custom_call.1} parent=27 // pred_fallthru
          _
        %s169 = sand.u32 %s56, 1
        %s170 = scalar_lea.sflag [#allocation6], %s169
        %s171 = sand.u32 %s56, 1
        %s172 = smul.addr %s171, 8
        %s173 = scalar_lea.vmem [#allocation5], %s172
        // Predicated region
        $region33: #{tpu_custom_call.1} parent=27 // pred_check
          %p174 = pneg %p69
        $region34: #{tpu_custom_call.1} parent=27 // pred_check_branch
          %176 = sbr.rel (%p174) target = $region36
        $region35: #{tpu_custom_call.1} parent=27 // pred_region
          %178 = dma.done %s170, 128
        $region36: #{tpu_custom_call.1} parent=27 // pred_fallthru
          _
        %s179 = sand.u32 %s30, 1
        %s180 = scalar_lea.sflag [#allocation3], %s179
        %s181 = sand.u32 %s30, 1
        %s182 = smul.addr %s181, 8
        %s183 = scalar_lea.vmem [#allocation2], %s182
        %p184 = pneg %p43
        %p185 = pneg %p40
        %s186 = sand.u32 %s56, 1
        %s187 = scalar_lea.sflag [#allocation6], %s186
        %s188 = sand.u32 %s56, 1
        %s189 = smul.addr %s188, 8
        %s190 = scalar_lea.vmem [#allocation5], %s189
        %p191 = pneg %p69
        %p192 = pneg %p66
        %p193 = pneg %p95
        %p194 = pneg %p92
        %s195 = sand.u32 %s82, 1
        %s196 = scalar_lea.sflag [#allocation4], %s195
        %s197 = sand.u32 %s82, 1
        %s198 = smul.addr %s197, 8
        %s199 = scalar_lea.vmem [#allocation7], %s198
        %v200 = vld [vmem:[%s163] ss:$4 sm:$0x3]
        %v201 = vld [vmem:[%s173] ss:$4 sm:$0x3]
        %v202 = vmul.f32 %v200, %v200
        %vm203 = vcmask 254976
        %v204 = vsel %vm203, %v202, 0.0
        %205 = vadd.xlane.f32.xlu0 %v204
        %v206 = vpop.xlane.xlu0 %205
        %v207 = vmul.f32 %v201, %v201
        %v208 = vsel %vm203, %v207, 0.0
        %209 = vadd.xlane.f32.xlu0 %v208
        %v210 = vpop.xlane.xlu0 %209
        %v211 = vmax.f32 %v206, 1e-24
        %v212 = vrsqrt.pop %v211
        %v213 = vmul.f32 %v212, %v211
        %v214 = vmul.f32 %v213, %v212
        %v215 = vmul.f32 0.5, %v214
        %v216 = vsub.f32 1.5, %v215
        %v217 = vmul.f32 %v212, %v216
        %vm218 = vweird.f32 %v211
        %vm219 = vweird.f32 %v212
        %vm220 = vmor %vm218, %vm219
        %v221 = vsel %vm220, %v212, %v217
        %v222 = vmax.f32 %v210, 1e-24
        %v223 = vrsqrt.pop %v222
        %v224 = vmul.f32 %v223, %v222
        %v225 = vmul.f32 %v224, %v223
        %v226 = vmul.f32 0.5, %v225
        %v227 = vsub.f32 1.5, %v226
        %v228 = vmul.f32 %v223, %v227
        %vm229 = vweird.f32 %v222
        %vm230 = vweird.f32 %v223
        %vm231 = vmor %vm229, %vm230
        %v232 = vsel %vm231, %v223, %v228
        %s233 = scalar_lea.vmem %s163, 1 [#allocation2]
        %v234 = vld [vmem:[%s233] ss:$4 sm:$0x3]
        %s235 = scalar_lea.vmem %s173, 1 [#allocation5]
        %v236 = vld [vmem:[%s235] ss:$4 sm:$0x3]
        %v237 = vmul.f32 %v234, %v234
        %v238 = vsel %vm203, %v237, 0.0
        %239 = vadd.xlane.f32.xlu0 %v238
        %v240 = vpop.xlane.xlu0 %239
        %v241 = vmul.f32 %v236, %v236
        %v242 = vsel %vm203, %v241, 0.0
        %243 = vadd.xlane.f32.xlu0 %v242
        %v244 = vpop.xlane.xlu0 %243
        %v245 = vmax.f32 %v240, 1e-24
        %v246 = vrsqrt.pop %v245
        %v247 = vmul.f32 %v246, %v245
        %v248 = vmul.f32 %v247, %v246
        %v249 = vmul.f32 0.5, %v248
        %v250 = vsub.f32 1.5, %v249
        %v251 = vmul.f32 %v246, %v250
        %vm252 = vweird.f32 %v245
        %vm253 = vweird.f32 %v246
        %vm254 = vmor %vm252, %vm253
        %v255 = vsel %vm254, %v246, %v251
        %v256 = vmax.f32 %v244, 1e-24
        %v257 = vrsqrt.pop %v256
        %v258 = vmul.f32 %v257, %v256
        %v259 = vmul.f32 %v258, %v257
        %v260 = vmul.f32 0.5, %v259
        %v261 = vsub.f32 1.5, %v260
        %v262 = vmul.f32 %v257, %v261
        %vm263 = vweird.f32 %v256
        %vm264 = vweird.f32 %v257
        %vm265 = vmor %vm263, %vm264
        %v266 = vsel %vm265, %v257, %v262
        %s267 = scalar_lea.vmem %s163, 2 [#allocation2]
        %v268 = vld [vmem:[%s267] ss:$4 sm:$0x3]
        %s269 = scalar_lea.vmem %s173, 2 [#allocation5]
        %v270 = vld [vmem:[%s269] ss:$4 sm:$0x3]
        %v271 = vmul.f32 %v268, %v268
        %v272 = vsel %vm203, %v271, 0.0
        %273 = vadd.xlane.f32.xlu0 %v272
        %v274 = vpop.xlane.xlu0 %273
        %v275 = vmul.f32 %v270, %v270
        %v276 = vsel %vm203, %v275, 0.0
        %277 = vadd.xlane.f32.xlu0 %v276
        %v278 = vpop.xlane.xlu0 %277
        %v279 = vmax.f32 %v274, 1e-24
        %v280 = vrsqrt.pop %v279
        %v281 = vmul.f32 %v280, %v279
        %v282 = vmul.f32 %v281, %v280
        %v283 = vmul.f32 0.5, %v282
        %v284 = vsub.f32 1.5, %v283
        %v285 = vmul.f32 %v280, %v284
        %vm286 = vweird.f32 %v279
        %vm287 = vweird.f32 %v280
        %vm288 = vmor %vm286, %vm287
        %v289 = vsel %vm288, %v280, %v285
        %v290 = vmax.f32 %v278, 1e-24
        %v291 = vrsqrt.pop %v290
        %v292 = vmul.f32 %v291, %v290
        %v293 = vmul.f32 %v292, %v291
        %v294 = vmul.f32 0.5, %v293
        %v295 = vsub.f32 1.5, %v294
        %v296 = vmul.f32 %v291, %v295
        %vm297 = vweird.f32 %v290
        %vm298 = vweird.f32 %v291
        %vm299 = vmor %vm297, %vm298
        %v300 = vsel %vm299, %v291, %v296
        %s301 = scalar_lea.vmem %s163, 3 [#allocation2]
        %v302 = vld [vmem:[%s301] ss:$4 sm:$0x3]
        %s303 = scalar_lea.vmem %s173, 3 [#allocation5]
        %v304 = vld [vmem:[%s303] ss:$4 sm:$0x3]
        %v305 = vmul.f32 %v302, %v302
        %v306 = vsel %vm203, %v305, 0.0
        %307 = vadd.xlane.f32.xlu0 %v306
        %v308 = vpop.xlane.xlu0 %307
        %v309 = vmul.f32 %v304, %v304
        %v310 = vsel %vm203, %v309, 0.0
        %311 = vadd.xlane.f32.xlu0 %v310
        %v312 = vpop.xlane.xlu0 %311
        %v313 = vmax.f32 %v308, 1e-24
        %v314 = vrsqrt.pop %v313
        %v315 = vmul.f32 %v314, %v313
        %v316 = vmul.f32 %v315, %v314
        %v317 = vmul.f32 0.5, %v316
        %v318 = vsub.f32 1.5, %v317
        %v319 = vmul.f32 %v314, %v318
        %vm320 = vweird.f32 %v313
        %vm321 = vweird.f32 %v314
        %vm322 = vmor %vm320, %vm321
        %v323 = vsel %vm322, %v314, %v319
        %v324 = vmax.f32 %v312, 1e-24
        %v325 = vrsqrt.pop %v324
        %v326 = vmul.f32 %v325, %v324
        %v327 = vmul.f32 %v326, %v325
        %v328 = vmul.f32 0.5, %v327
        %v329 = vsub.f32 1.5, %v328
        %v330 = vmul.f32 %v325, %v329
        %vm331 = vweird.f32 %v324
        %vm332 = vweird.f32 %v325
        %vm333 = vmor %vm331, %vm332
        %v334 = vsel %vm333, %v325, %v330
        %v335 = vmul.f32 %v221, %v232
        %v336 = vmul.f32 %v221, %v266
        %v337 = vmul.f32 %v221, %v300
        %v338 = vmul.f32 %v221, %v334
        %v339 = vmul.f32 %v255, %v232
        %v340 = vmul.f32 %v255, %v266
        %v341 = vmul.f32 %v255, %v300
        %v342 = vmul.f32 %v255, %v334
        %v343 = vmul.f32 %v289, %v232
        %v344 = vmul.f32 %v289, %v266
        %v345 = vmul.f32 %v289, %v300
        %v346 = vmul.f32 %v289, %v334
        %v347 = vmul.f32 %v323, %v232
        %v348 = vmul.f32 %v323, %v266
        %v349 = vmul.f32 %v323, %v300
        %v350 = vmul.f32 %v323, %v334
        %v351 = vmul.f32 %v200, %v201
        %v352 = vsel %vm203, %v351, 0.0
        %353 = vadd.xlane.f32.xlu0 %v352
        %v354 = vpop.xlane.xlu0 %353
        %v355 = vmul.f32 %v354, %v335
        %v356 = vmax.f32 %v355, 0.0005
        %v357 = vmin.f32 %v356, 0.9995
        %v358 = vsub.f32 1.0, %v357
        %v359 = vlog2.pop %v358
        %v360 = vmul.f32 %v359, 0.6931472
        %v361 = vsub.f32 0.0, %v360
        %v362 = vmul.f32 %v200, %v236
        %v363 = vsel %vm203, %v362, 0.0
        %364 = vadd.xlane.f32.xlu0 %v363
        %v365 = vpop.xlane.xlu0 %364
        %v366 = vmul.f32 %v365, %v336
        %v367 = vmax.f32 %v366, 0.0005
        %v368 = vmin.f32 %v367, 0.9995
        %v369 = vsub.f32 1.0, %v368
        %v370 = vlog2.pop %v369
        %v371 = vmul.f32 %v370, 0.6931472
        %v372 = vsub.f32 %v361, %v371
        %v373 = vmul.f32 %v200, %v270
        %v374 = vsel %vm203, %v373, 0.0
        %375 = vadd.xlane.f32.xlu0 %v374
        %v376 = vpop.xlane.xlu0 %375
        %v377 = vmul.f32 %v376, %v337
        %v378 = vmax.f32 %v377, 0.0005
        %v379 = vmin.f32 %v378, 0.9995
        %v380 = vsub.f32 1.0, %v379
        %v381 = vlog2.pop %v380
        %v382 = vmul.f32 %v381, 0.6931472
        %v383 = vsub.f32 %v372, %v382
        %v384 = vmul.f32 %v200, %v304
        %v385 = vsel %vm203, %v384, 0.0
        %386 = vadd.xlane.f32.xlu0 %v385
        %v387 = vpop.xlane.xlu0 %386
        %v388 = vmul.f32 %v387, %v338
        %v389 = vmax.f32 %v388, 0.0005
        %v390 = vmin.f32 %v389, 0.9995
        %v391 = vsub.f32 1.0, %v390
        %v392 = vlog2.pop %v391
        %v393 = vmul.f32 %v392, 0.6931472
        %v394 = vsub.f32 %v383, %v393
        %v395 = vmul.f32 %v234, %v201
        %v396 = vsel %vm203, %v395, 0.0
        %397 = vadd.xlane.f32.xlu0 %v396
        %v398 = vpop.xlane.xlu0 %397
        %v399 = vmul.f32 %v398, %v339
        %v400 = vmax.f32 %v399, 0.0005
        %v401 = vmin.f32 %v400, 0.9995
        %v402 = vsub.f32 1.0, %v401
        %v403 = vlog2.pop %v402
        %v404 = vmul.f32 %v403, 0.6931472
        %v405 = vsub.f32 %v394, %v404
        %v406 = vmul.f32 %v234, %v236
        %v407 = vsel %vm203, %v406, 0.0
        %408 = vadd.xlane.f32.xlu0 %v407
        %v409 = vpop.xlane.xlu0 %408
        %v410 = vmul.f32 %v409, %v340
        %v411 = vmax.f32 %v410, 0.0005
        %v412 = vmin.f32 %v411, 0.9995
        %v413 = vsub.f32 1.0, %v412
        %v414 = vlog2.pop %v413
        %v415 = vmul.f32 %v414, 0.6931472
        %v416 = vsub.f32 %v405, %v415
        %v417 = vmul.f32 %v234, %v270
        %v418 = vsel %vm203, %v417, 0.0
        %419 = vadd.xlane.f32.xlu0 %v418
        %v420 = vpop.xlane.xlu0 %419
        %v421 = vmul.f32 %v420, %v341
        %v422 = vmax.f32 %v421, 0.0005
        %v423 = vmin.f32 %v422, 0.9995
        %v424 = vsub.f32 1.0, %v423
        %v425 = vlog2.pop %v424
        %v426 = vmul.f32 %v425, 0.6931472
        %v427 = vsub.f32 %v416, %v426
        %v428 = vmul.f32 %v234, %v304
        %v429 = vsel %vm203, %v428, 0.0
        %430 = vadd.xlane.f32.xlu0 %v429
        %v431 = vpop.xlane.xlu0 %430
        %v432 = vmul.f32 %v431, %v342
        %v433 = vmax.f32 %v432, 0.0005
        %v434 = vmin.f32 %v433, 0.9995
        %v435 = vsub.f32 1.0, %v434
        %v436 = vlog2.pop %v435
        %v437 = vmul.f32 %v436, 0.6931472
        %v438 = vsub.f32 %v427, %v437
        %v439 = vmul.f32 %v268, %v201
        %v440 = vsel %vm203, %v439, 0.0
        %441 = vadd.xlane.f32.xlu0 %v440
        %v442 = vpop.xlane.xlu0 %441
        %v443 = vmul.f32 %v442, %v343
        %v444 = vmax.f32 %v443, 0.0005
        %v445 = vmin.f32 %v444, 0.9995
        %v446 = vsub.f32 1.0, %v445
        %v447 = vlog2.pop %v446
        %v448 = vmul.f32 %v447, 0.6931472
        %v449 = vsub.f32 %v438, %v448
        %v450 = vmul.f32 %v268, %v236
        %v451 = vsel %vm203, %v450, 0.0
        %452 = vadd.xlane.f32.xlu0 %v451
        %v453 = vpop.xlane.xlu0 %452
        %v454 = vmul.f32 %v453, %v344
        %v455 = vmax.f32 %v454, 0.0005
        %v456 = vmin.f32 %v455, 0.9995
        %v457 = vsub.f32 1.0, %v456
        %v458 = vlog2.pop %v457
        %v459 = vmul.f32 %v458, 0.6931472
        %v460 = vsub.f32 %v449, %v459
        %v461 = vmul.f32 %v268, %v270
        %v462 = vsel %vm203, %v461, 0.0
        %463 = vadd.xlane.f32.xlu0 %v462
        %v464 = vpop.xlane.xlu0 %463
        %v465 = vmul.f32 %v464, %v345
        %v466 = vmax.f32 %v465, 0.0005
        %v467 = vmin.f32 %v466, 0.9995
        %v468 = vsub.f32 1.0, %v467
        %v469 = vlog2.pop %v468
        %v470 = vmul.f32 %v469, 0.6931472
        %v471 = vsub.f32 %v460, %v470
        %v472 = vmul.f32 %v268, %v304
        %v473 = vsel %vm203, %v472, 0.0
        %474 = vadd.xlane.f32.xlu0 %v473
        %v475 = vpop.xlane.xlu0 %474
        %v476 = vmul.f32 %v475, %v346
        %v477 = vmax.f32 %v476, 0.0005
        %v478 = vmin.f32 %v477, 0.9995
        %v479 = vsub.f32 1.0, %v478
        %v480 = vlog2.pop %v479
        %v481 = vmul.f32 %v480, 0.6931472
        %v482 = vsub.f32 %v471, %v481
        %v483 = vmul.f32 %v302, %v201
        %v484 = vsel %vm203, %v483, 0.0
        %485 = vadd.xlane.f32.xlu0 %v484
        %v486 = vpop.xlane.xlu0 %485
        %v487 = vmul.f32 %v486, %v347
        %v488 = vmax.f32 %v487, 0.0005
        %v489 = vmin.f32 %v488, 0.9995
        %v490 = vsub.f32 1.0, %v489
        %v491 = vlog2.pop %v490
        %v492 = vmul.f32 %v491, 0.6931472
        %v493 = vsub.f32 %v482, %v492
        %v494 = vmul.f32 %v302, %v236
        %v495 = vsel %vm203, %v494, 0.0
        %496 = vadd.xlane.f32.xlu0 %v495
        %v497 = vpop.xlane.xlu0 %496
        %v498 = vmul.f32 %v497, %v348
        %v499 = vmax.f32 %v498, 0.0005
        %v500 = vmin.f32 %v499, 0.9995
        %v501 = vsub.f32 1.0, %v500
        %v502 = vlog2.pop %v501
        %v503 = vmul.f32 %v502, 0.6931472
        %v504 = vsub.f32 %v493, %v503
        %v505 = vmul.f32 %v302, %v270
        %v506 = vsel %vm203, %v505, 0.0
        %507 = vadd.xlane.f32.xlu0 %v506
        %v508 = vpop.xlane.xlu0 %507
        %v509 = vmul.f32 %v508, %v349
        %v510 = vmax.f32 %v509, 0.0005
        %v511 = vmin.f32 %v510, 0.9995
        %v512 = vsub.f32 1.0, %v511
        %v513 = vlog2.pop %v512
        %v514 = vmul.f32 %v513, 0.6931472
        %v515 = vsub.f32 %v504, %v514
        %v516 = vmul.f32 %v302, %v304
        %v517 = vsel %vm203, %v516, 0.0
        %518 = vadd.xlane.f32.xlu0 %v517
        %v519 = vpop.xlane.xlu0 %518
        %v520 = vmul.f32 %v519, %v350
        %v521 = vmax.f32 %v520, 0.0005
        %v522 = vmin.f32 %v521, 0.9995
        %v523 = vsub.f32 1.0, %v522
        %v524 = vlog2.pop %v523
        %v525 = vmul.f32 %v524, 0.6931472
        %v526 = vsub.f32 %v515, %v525
        %vm527 = vcmask 1024
        %v528 = vsel %vm527, %v526, 0.0
        %529 = vadd.xlane.f32.xlu0 %v528
        %v530 = vpop.xlane.xlu0 %529
        %v531 = vrot.slane %v530, 4
        %v532 = vadd.f32 %v530, %v531
        %v533 = vrot.slane %v532, 2
        %v534 = vadd.f32 %v532, %v533
        %v535 = vrot.slane %v534, 1
        %v536 = vadd.f32 %v534, %v535
        %s537 = vtos %v536
        %v538 = vstv %s537
        %539 = vst [vmem:[%s199] sm:$0xff] %v538
        %s540 = sand.u32 %s82, 1
        %s541 = scalar_lea.sflag [#allocation4], %s540
        %s542 = sand.u32 %s82, 1
        %s543 = smul.addr %s542, 8
        %s544 = scalar_lea.vmem [#allocation7], %s543
        // Predicated region
        $region37: #{tpu_custom_call.1} parent=27 // pred_check
          %p545 = pneg %p92
        $region38: #{tpu_custom_call.1} parent=27 // pred_check_branch
          %547 = sbr.rel (%p545) target = $region40
        $region39: #{tpu_custom_call.1} parent=27 // pred_region
          %549 = vsyncadd %s541, 0
          %s550 = smul.addr %s22, 8
          %s551 = scalar_lea.hbm %s2, %s550
          %s553 = sshll.u32 %s544, 4
          %s554 = int_to_ptr.vmem [resolvable:$true] %s553
          %s555 = sshll.u32 %s551, 4
          %s556 = int_to_ptr.hbm [resolvable:$true] %s555
          %558 = dma.vmem_to_hbm [thread:$0]  %s554, 128, %s556, %s541
        $region40: #{tpu_custom_call.1} parent=27 // pred_fallthru
          _
      $region28: #{tpu_custom_call.1} parent=5 // pred_fallthru
        _
      %p559 = scmp.le.s32.totalorder 2, %s17
      // Predicated region
      $region41: #{tpu_custom_call.1} parent=5 // pred_check
        %p560 = pneg %p559
      $region42: #{tpu_custom_call.1} parent=5 // pred_check_branch
        %562 = sbr.rel (%p560) target = $region44
      $region43: #{tpu_custom_call.1} parent=5 // pred_region
        %s563 = ssub.s32 %s17, 2
        // Predicated region
        $region45: #{tpu_custom_call.1} parent=43 // pred_check
          %p564 = pneg %p98
        $region46: #{tpu_custom_call.1} parent=43 // pred_check_branch
          %566 = sbr.rel (%p564) target = $region48
        $region47: #{tpu_custom_call.1} parent=43 // pred_region
          %s567 = sand.u32 %s83, 1
          %s568 = scalar_lea.sflag [#allocation4], %s567
          %s569 = sand.u32 %s83, 1
          %s570 = smul.addr %s569, 8
          %s571 = scalar_lea.vmem [#allocation7], %s570
          %573 = dma.done %s568, 128
        $region48: #{tpu_custom_call.1} parent=43 // pred_fallthru
          _
      $region44: #{tpu_custom_call.1} parent=5 // pred_fallthru
        _
    $region6: #{tpu_custom_call.1} parent=1 // loop_footer
      %s21 = sadd.s32 1, %s17
    $region7: #{tpu_custom_call.1} parent=1 // loop_footer_branch
      %16 = sbr.rel target = $region3
    $region8: #{tpu_custom_call.1} parent=1 // loop_exit
      _
    %574 = vsyncpa [#allocation3], 1
    %s575 = scalar_lea.sflag [#allocation3], 1
    %576 = vsyncpa %s575, 1
    %577 = vsyncpa [#allocation6], 1
    %s578 = scalar_lea.sflag [#allocation6], 1
    %579 = vsyncpa %s578, 1
    %580 = vsyncpa [#allocation4], 1
    %s581 = scalar_lea.sflag [#allocation4], 1
    %582 = vsyncpa %s581, 1

</llo_original>
